<compile_context>
chip_gen: v6e
topology: v6e:2x2x1
jax: 0.10.0
libtpu: 0.0.40
codegen_flags: <defaults>
</compile_context>

<pallas_src>
import functools

import numpy as np
import jax
import jax.numpy as jnp
from jax.experimental import pallas as pl
from jax.experimental.pallas import tpu as pltpu


# -----------------------------------------------------------------------------
# DCT matrices (match scipy.fftpack.dct/idct(np.eye(n), type=2, norm=None))
# -----------------------------------------------------------------------------
def dct_matrix(n):
    # D[i, k] = 2 * cos(pi * k * (2i + 1) / (2n))    (row i = DCT-II of e_i)
    i = np.arange(n, dtype=np.float64)[:, None]
    k = np.arange(n, dtype=np.float64)[None, :]
    return 2.0 * np.cos(np.pi * k * (2.0 * i + 1.0) / (2.0 * n))


def idct_matrix(n):
    # Di[i, k] = 1 if i == 0 else 2 * cos(pi * i * (2k + 1) / (2n))
    i = np.arange(n, dtype=np.float64)[:, None]
    k = np.arange(n, dtype=np.float64)[None, :]
    D = 2.0 * np.cos(np.pi * i * (2.0 * k + 1.0) / (2.0 * n))
    D[0, :] = 1.0
    return D


# -----------------------------------------------------------------------------
# Pallas kernel: B samples per grid step, lane-dense (last dim = H*W) blocks
# -----------------------------------------------------------------------------
def dct_conv2d_kernel(x_ref, w_ref, kf_ref, ki_ref, v_ref, th_ref, o_ref,
                      *, pods, out_ch, residual):
    # x_ref : (B, C, H*W)  VMEM        w_ref : (P*O, C)     VMEM
    # kf_ref: (H*W, H*W)   forward 2-D DCT (kron(Dh, Dw))
    # ki_ref: (H*W, H*W)   inverse 2-D DCT (kron(Dhi, Dwi))
    # v_ref / th_ref: (P*O, H*W)  gains / thresholds (pod p repeated O times)
    # o_ref : (B, O, H*W)
    B, C, HW = x_ref.shape
    PO = w_ref.shape[0]
    O = out_ch

    x = x_ref[...]                                                  # (B, C, HW)

    # --- forward 2-D DCT: one lane-dense MXU matmul over all batch*channel rows
    z = jnp.dot(x.reshape(B * C, HW), kf_ref[...],
                preferred_element_type=jnp.float32)                 # (B*C, HW)
    z = z.reshape(B, C, HW)

    # --- 1x1 conv for all pods at once: one batched MXU matmul ----------------
    w_b = jnp.broadcast_to(w_ref[...][None], (B, PO, C))            # tiny bcast
    mix = jnp.einsum('bpc,bct->bpt', w_b, z,
                     preferred_element_type=jnp.float32)            # (B, PO, HW)

    # --- per-pod gain + soft-threshold + pod sum (pure element-wise VPU work) --
    # TODO(synk): SoftThresholding class source was not provided; implemented as
    # the standard learnable soft-thresholding relu(x - t) - relu(-x - t).
    a = mix * v_ref[...][None]                                      # (B, PO, HW)
    t = th_ref[...][None]
    f5 = jnp.maximum(a - t, 0.0) - jnp.maximum(-a - t, 0.0)
    f6 = f5[:, 0:O]
    for p in range(1, pods):                                        # pods is small/static
        f6 = f6 + f5[:, p * O:(p + 1) * O]                          # (B, O, HW)

    # --- inverse 2-D DCT: one lane-dense MXU matmul ----------------------------
    y = jnp.dot(f6.reshape(B * O, HW), ki_ref[...],
                preferred_element_type=jnp.float32)
    y = y.reshape(B, O, HW)

    if residual:
        y = y + x
    o_ref[...] = y.astype(o_ref.dtype)


# -----------------------------------------------------------------------------
# Wrapper: parameter packing, Kronecker DCT matrices, batch tiling, BlockSpecs
# -----------------------------------------------------------------------------
def _pick_batch_tile(N, C, O, P, HW, vmem_budget_bytes=12 << 20):
    # Fixed cost: both (HW, HW) DCT matrices (double-buffered by the pipeline)
    # plus the small per-pod parameter blocks.
    fixed = 4 * (2 * 2 * HW * HW + 2 * 2 * P * O * HW + 2 * 2 * P * O * C)
    # Per-sample cost: double-buffered x / out blocks + live f32 intermediates
    # (DCT output, pod stack ~3 live copies, pod sum, IDCT output).
    per_sample = 4 * HW * (2 * C + 2 * O + C + 3 * P * O + 2 * O)
    avail = max(vmem_budget_bytes - fixed, per_sample)
    b = int(min(max(avail // per_sample, 1), N))
    if N >= 2:
        b = min(b, max(1, N // 2))   # >=2 grid steps so both v7x TensorCores get work
    return max(1, b)


def dct_conv2d(x, v, wgt, th, residual=True, batch_tile=None):
    N, C, H, W = x.shape
    P, O, C2 = wgt.shape
    assert C2 == C
    if residual:
        assert O == C, "residual add requires out_channels == in_channels"
    HW = H * W
    PO = P * O

    # TODO(synk): for large H*W (> ~1024) the (HW, HW) Kronecker DCT matrices no
    # longer fit comfortably in VMEM; that regime needs the separable row/column
    # DCT matmul fallback.
    assert HW * HW * 4 <= (4 << 20), "Kronecker DCT matrix too large for this kernel"

    # Lane-dense spatial flatten (free view of contiguous NCHW data).
    x2 = x.astype(jnp.float32).reshape(N, C, HW)

    Dh, Dw = dct_matrix(H), dct_matrix(W)
    Dhi, Dwi = idct_matrix(H), idct_matrix(W)
    # kron(Dh, Dw)[h*W + w, m*W + k] = Dh[h, m] * Dw[w, k]  -> 2-D DCT as one matmul
    Kf = jnp.asarray(np.kron(Dh, Dw), jnp.float32)     # (HW, HW) forward 2-D DCT
    Ki = jnp.asarray(np.kron(Dhi, Dwi), jnp.float32)   # (HW, HW) inverse 2-D DCT

    # 1x1 conv weights for all pods stacked -> VMEM input (feeds the MXU).
    w_all = wgt.astype(jnp.float32).reshape(PO, C)
    # Per-pod gain / threshold flattened to (HW,) (same (m, k) ordering as the
    # DCT-domain data) and repeated O times so they broadcast against the
    # (P*O)-channel stack.
    v_flat = jnp.repeat(v.astype(jnp.float32).reshape(P, HW), O, axis=0)    # (PO, HW)
    th_flat = jnp.repeat(th.astype(jnp.float32).reshape(P, HW), O, axis=0)  # (PO, HW)

    B = batch_tile or _pick_batch_tile(N, C, O, P, HW)
    num_blocks = -(-N // B)
    Np = num_blocks * B
    if Np != N:
        x2 = jnp.pad(x2, ((0, Np - N), (0, 0), (0, 0)))

    kernel = functools.partial(dct_conv2d_kernel, pods=P, out_ch=O,
                               residual=residual)
    const2 = lambda n: (0, 0)

    out = pl.pallas_call(
        kernel,
        out_shape=jax.ShapeDtypeStruct((Np, O, HW), jnp.float32),
        grid=(num_blocks,),
        in_specs=[
            pl.BlockSpec((B, C, HW), lambda n: (n, 0, 0)),   # x  (lane-dense)
            pl.BlockSpec((PO, C), const2),                   # conv weights (VMEM)
            pl.BlockSpec((HW, HW), const2),                  # forward 2-D DCT matrix
            pl.BlockSpec((HW, HW), const2),                  # inverse 2-D DCT matrix
            pl.BlockSpec((PO, HW), const2),                  # gains v
            pl.BlockSpec((PO, HW), const2),                  # thresholds
        ],
        out_specs=pl.BlockSpec((B, O, HW), lambda n: (n, 0, 0)),   # lane-dense out
        compiler_params=pltpu.CompilerParams(
            dimension_semantics=("parallel",)),
    )(x2, w_all, Kf, Ki, v_flat, th_flat)

    return out[:N].reshape(N, O, H, W)


# -----------------------------------------------------------------------------
# Pure numpy (float64) reference of the PyTorch forward pass (original order)
# -----------------------------------------------------------------------------
def reference_numpy(x, v, wgt, th, residual=True):
    x = np.asarray(x, np.float64)
    v = np.asarray(v, np.float64)
    wgt = np.asarray(wgt, np.float64)
    th = np.asarray(th, np.float64)
    _, _, H, W = x.shape
    Dw, Dh = dct_matrix(W), dct_matrix(H)
    Dwi, Dhi = idct_matrix(W), idct_matrix(H)

    f1 = np.einsum('nchw,wk->nchk', x, Dw)           # DCT axis=-1
    f2 = np.einsum('nchw,hk->nckw', f1, Dh)          # DCT axis=-2
    acc = 0.0
    for i in range(v.shape[0]):
        f3 = v[i] * f2
        f4 = np.einsum('oc,nchw->nohw', wgt[i], f3)  # 1x1 conv, no bias
        f5 = np.maximum(f4 - th[i], 0.0) - np.maximum(-f4 - th[i], 0.0)
        acc = acc + f5
    f7 = np.einsum('nohw,wk->nohk', acc, Dwi)        # IDCT axis=-1
    f8 = np.einsum('nohw,hk->nokw', f7, Dhi)         # IDCT axis=-2
    return f8 + x if residual else f8


if __name__ == "__main__":
    # Small shapes consistent with DCTConv2D(height=16, width=16, in=4, out=4, pods=2)
    N, C, O, H, W, P = 4, 4, 4, 16, 16, 2

    key = jax.random.PRNGKey(0)
    kx, kv, kw, kt = jax.random.split(key, 4)
    x = jax.random.normal(kx, (N, C, H, W), jnp.float32)
    v = jax.random.uniform(kv, (P, H, W), jnp.float32)                 # torch.rand((H, W))
    bound = 1.0 / np.sqrt(C)                                           # Conv2d default init scale
    wgt = jax.random.uniform(kw, (P, O, C), jnp.float32, -bound, bound)
    th = jax.random.uniform(kt, (P, H, W), jnp.float32, 0.0, 0.1)      # soft-threshold params

    y = dct_conv2d(x, v, wgt, th, residual=True)
    y = jax.block_until_ready(y)

    ref = reference_numpy(x, v, wgt, th, residual=True)
    # Tolerance sized for default-precision MXU matmuls, scaled by the output
    # magnitude (un-normalized DCT/IDCT amplify values).
    scale = float(np.max(np.abs(ref)))
    np.testing.assert_allclose(np.asarray(y, np.float64), ref,
                               rtol=3e-2, atol=3e-2 * scale)

    print("KERNEL_OK")
</pallas_src>

<mosaic_0001>
module attributes {stable_mosaic.version = 11 : i64} {
  func.func @dct_conv2d_kernel(%arg0: i32, %arg1: memref<2x4x256xf32, #tpu.memory_space<vmem>>, %arg2: memref<8x4xf32, #tpu.memory_space<vmem>>, %arg3: memref<256x256xf32, #tpu.memory_space<vmem>>, %arg4: memref<256x256xf32, #tpu.memory_space<vmem>>, %arg5: memref<8x256xf32, #tpu.memory_space<vmem>>, %arg6: memref<8x256xf32, #tpu.memory_space<vmem>>, %arg7: memref<2x4x256xf32, #tpu.memory_space<vmem>>) attributes {dimension_semantics = [#tpu.dimension_semantics<parallel>], iteration_bounds = array<i64: 2>, scalar_prefetch = 0 : i64, scratch_operands = 0 : i64, tpu.core_type = #tpu.core_type<tc>, window_params = [{transform_indices = @transform_0, window_bounds = array<i64: 2, 4, 256>}, {pipeline_mode = #tpu.pipeline_mode<synchronous>, transform_indices = @transform_1, window_bounds = array<i64: 8, 4>}, {pipeline_mode = #tpu.pipeline_mode<synchronous>, transform_indices = @transform_2, window_bounds = array<i64: 256, 256>}, {pipeline_mode = #tpu.pipeline_mode<synchronous>, transform_indices = @transform_3, window_bounds = array<i64: 256, 256>}, {pipeline_mode = #tpu.pipeline_mode<synchronous>, transform_indices = @transform_4, window_bounds = array<i64: 8, 256>}, {pipeline_mode = #tpu.pipeline_mode<synchronous>, transform_indices = @transform_5, window_bounds = array<i64: 8, 256>}, {transform_indices = @transform_6, window_bounds = array<i64: 2, 4, 256>}]} {
    %c0 = arith.constant 0 : index
    %c0_0 = arith.constant 0 : index
    %c0_1 = arith.constant 0 : index
    %0 = vector.load %arg1[%c0, %c0_0, %c0_1] : memref<2x4x256xf32, #tpu.memory_space<vmem>>, vector<2x4x256xf32>
    %1 = vector.shape_cast %0 : vector<2x4x256xf32> to vector<8x256xf32>
    %c0_2 = arith.constant 0 : index
    %c0_3 = arith.constant 0 : index
    %2 = vector.load %arg3[%c0_2, %c0_3] : memref<256x256xf32, #tpu.memory_space<vmem>>, vector<256x256xf32>
    %cst = arith.constant dense<0.000000e+00> : vector<8x256xf32>
    %3 = tpu.matmul %1, %2, %cst {dimension_numbers = #tpu.dot_dimension_numbers<[1], [0], [0], [1], [0, 0, 1, 1], [], []>} : vector<8x256xf32>, vector<256x256xf32>, vector<8x256xf32> -> vector<8x256xf32>
    %4 = vector.shape_cast %3 : vector<8x256xf32> to vector<2x4x256xf32>
    %c0_4 = arith.constant 0 : index
    %c0_5 = arith.constant 0 : index
    %5 = vector.load %arg2[%c0_4, %c0_5] : memref<8x4xf32, #tpu.memory_space<vmem>>, vector<8x4xf32>
    %6 = vector.shape_cast %5 : vector<8x4xf32> to vector<1x8x4xf32>
    %7 = vector.shape_cast %6 : vector<1x8x4xf32> to vector<1x8x4xf32>
    %8 = vector.broadcast %7 : vector<1x8x4xf32> to vector<2x8x4xf32>
    "tpu.trace_start"() <{level = 10 : i32, message = "bpc,bct->bpt"}> : () -> ()
    %cst_6 = arith.constant dense<0.000000e+00> : vector<2x8x256xf32>
    %9 = tpu.matmul %8, %4, %cst_6 {dimension_numbers = #tpu.dot_dimension_numbers<[2], [1], [1], [2], [0, 0, 0, 1, 1, 2], [0], [0]>} : vector<2x8x4xf32>, vector<2x4x256xf32>, vector<2x8x256xf32> -> vector<2x8x256xf32>
    "tpu.trace_stop"() : () -> ()
    %c0_7 = arith.constant 0 : index
    %c0_8 = arith.constant 0 : index
    %10 = vector.load %arg5[%c0_7, %c0_8] : memref<8x256xf32, #tpu.memory_space<vmem>>, vector<8x256xf32>
    %11 = vector.shape_cast %10 : vector<8x256xf32> to vector<1x8x256xf32>
    %12 = vector.broadcast %11 : vector<1x8x256xf32> to vector<2x8x256xf32>
    %13 = arith.mulf %9, %12 : vector<2x8x256xf32>
    %c0_9 = arith.constant 0 : index
    %c0_10 = arith.constant 0 : index
    %14 = vector.load %arg6[%c0_9, %c0_10] : memref<8x256xf32, #tpu.memory_space<vmem>>, vector<8x256xf32>
    %15 = vector.shape_cast %14 : vector<8x256xf32> to vector<1x8x256xf32>
    %16 = vector.broadcast %15 : vector<1x8x256xf32> to vector<2x8x256xf32>
    %17 = arith.subf %13, %16 : vector<2x8x256xf32>
    %cst_11 = arith.constant 0.000000e+00 : f32
    %18 = vector.broadcast %cst_11 : f32 to vector<2x8x256xf32>
    %19 = arith.maximumf %17, %18 : vector<2x8x256xf32>
    %cst_12 = arith.constant 0.000000e+00 : f32
    %20 = vector.broadcast %cst_12 : f32 to vector<2x8x256xf32>
    %21 = arith.subf %20, %13 : vector<2x8x256xf32>
    %22 = vector.broadcast %15 : vector<1x8x256xf32> to vector<2x8x256xf32>
    %23 = arith.subf %21, %22 : vector<2x8x256xf32>
    %cst_13 = arith.constant 0.000000e+00 : f32
    %24 = vector.broadcast %cst_13 : f32 to vector<2x8x256xf32>
    %25 = arith.maximumf %23, %24 : vector<2x8x256xf32>
    %26 = arith.subf %19, %25 : vector<2x8x256xf32>
    %27 = vector.extract_strided_slice %26 {offsets = [0, 0, 0], sizes = [2, 4, 256], strides = [1, 1, 1]} : vector<2x8x256xf32> to vector<2x4x256xf32>
    %28 = vector.extract_strided_slice %26 {offsets = [0, 4, 0], sizes = [2, 4, 256], strides = [1, 1, 1]} : vector<2x8x256xf32> to vector<2x4x256xf32>
    %29 = arith.addf %27, %28 : vector<2x4x256xf32>
    %30 = vector.shape_cast %29 : vector<2x4x256xf32> to vector<8x256xf32>
    %c0_14 = arith.constant 0 : index
    %c0_15 = arith.constant 0 : index
    %31 = vector.load %arg4[%c0_14, %c0_15] : memref<256x256xf32, #tpu.memory_space<vmem>>, vector<256x256xf32>
    %cst_16 = arith.constant dense<0.000000e+00> : vector<8x256xf32>
    %32 = tpu.matmul %30, %31, %cst_16 {dimension_numbers = #tpu.dot_dimension_numbers<[1], [0], [0], [1], [0, 0, 1, 1], [], []>} : vector<8x256xf32>, vector<256x256xf32>, vector<8x256xf32> -> vector<8x256xf32>
    %33 = vector.shape_cast %32 : vector<8x256xf32> to vector<2x4x256xf32>
    %34 = arith.addf %33, %0 : vector<2x4x256xf32>
    %c0_17 = arith.constant 0 : index
    %c0_18 = arith.constant 0 : index
    %c0_19 = arith.constant 0 : index
    %35 = vector.load %arg7[%c0_17, %c0_18, %c0_19] : memref<2x4x256xf32, #tpu.memory_space<vmem>>, vector<2x4x256xf32>
    tpu.vector_store %arg7[%c0_17, %c0_18, %c0_19], %34 {strides = array<i32>} : memref<2x4x256xf32, #tpu.memory_space<vmem>>, vector<2x4x256xf32>,
    return
  }
  func.func @transform_0(%arg0: i32) -> (i32, i32, i32) {
    %c0_i32 = arith.constant 0 : i32
    %c0_i32_0 = arith.constant 0 : i32
    %c0_i32_1 = arith.constant 0 : i32
    return %arg0, %c0_i32, %c0_i32_0 : i32, i32, i32
  }
  func.func @transform_1(%arg0: i32) -> (i32, i32) {
    %c0_i32 = arith.constant 0 : i32
    %c0_i32_0 = arith.constant 0 : i32
    %c0_i32_1 = arith.constant 0 : i32
    return %c0_i32, %c0_i32_0 : i32, i32
  }
  func.func @transform_2(%arg0: i32) -> (i32, i32) {
    %c0_i32 = arith.constant 0 : i32
    %c0_i32_0 = arith.constant 0 : i32
    %c0_i32_1 = arith.constant 0 : i32
    return %c0_i32, %c0_i32_0 : i32, i32
  }
  func.func @transform_3(%arg0: i32) -> (i32, i32) {
    %c0_i32 = arith.constant 0 : i32
    %c0_i32_0 = arith.constant 0 : i32
    %c0_i32_1 = arith.constant 0 : i32
    return %c0_i32, %c0_i32_0 : i32, i32
  }
  func.func @transform_4(%arg0: i32) -> (i32, i32) {
    %c0_i32 = arith.constant 0 : i32
    %c0_i32_0 = arith.constant 0 : i32
    %c0_i32_1 = arith.constant 0 : i32
    return %c0_i32, %c0_i32_0 : i32, i32
  }
  func.func @transform_5(%arg0: i32) -> (i32, i32) {
    %c0_i32 = arith.constant 0 : i32
    %c0_i32_0 = arith.constant 0 : i32
    %c0_i32_1 = arith.constant 0 : i32
    return %c0_i32, %c0_i32_0 : i32, i32
  }
  func.func @transform_6(%arg0: i32) -> (i32, i32, i32) {
    %c0_i32 = arith.constant 0 : i32
    %c0_i32_0 = arith.constant 0 : i32
    %c0_i32_1 = arith.constant 0 : i32
    return %arg0, %c0_i32, %c0_i32_0 : i32, i32, i32
  }
}

</mosaic_0001>

<llo_original>
// kernel: tpu_custom_call.1
$region0: #{tpu_custom_call.1}
  #allocation0 [shape = 'u32[]', space=smem, size = 0x4, offset = 0x4, fixed_abs, tag = 'smem constant byte address 0x4 - core index']
  #allocation1 [shape = 'u32[144,128]{1,0:T(1,128)}', space=vmem, size = 0x12000, scoped, tag = 'internal scratch']
  %s0 = inlined_call_operand.hbm [shape: f32[4,4,256], index: 0, kind: input, shape index: {}]
  %s1 = inlined_call_operand.vmem [shape: f32[8,4], index: 1, kind: input, shape index: {}]
  %s2 = inlined_call_operand.hbm [shape: f32[256,256], index: 2, kind: input, shape index: {}]
  %s3 = inlined_call_operand.hbm [shape: f32[256,256], index: 3, kind: input, shape index: {}]
  %s4 = inlined_call_operand.vmem [shape: f32[8,256], index: 4, kind: input, shape index: {}]
  %s5 = inlined_call_operand.hbm [shape: f32[8,256], index: 5, kind: input, shape index: {}]
  %s6 = inlined_call_operand.hbm [shape: f32[4,4,256], index: 6, kind: output, shape index: {}]
  %s7 = sld [smem:[#allocation0]]
  $region73: #{tpu_custom_call.1} parent=0
    _
  %s9 = ssub.s32 1, %s7
  %s10 = scalar_select 0, %s9, %s7
  $region1: #{tpu_custom_call.1} parent=0
    #allocation2 [shape = 'u8[16384]{0}', space=vmem, size = 0x4000, scoped, tag = 'input window, operand 0']
    #allocation3 [shape = 's32[2]{0}', space=sflag, size = 0x8, scoped, tag = 'scoped memory for tpu_custom_call.1']
    #allocation4 [shape = 's32[2]{0}', space=sflag, size = 0x8, scoped, tag = 'scoped memory for tpu_custom_call.1']
    #allocation5 [shape = 'u8[262144]{0}', space=vmem, size = 0x40000, scoped, tag = 'input window, operand 2, single buffered']
    #allocation6 [shape = 's32[1]{0}', space=sflag, size = 0x4, scoped, tag = 'scoped memory for tpu_custom_call.1']
    #allocation7 [shape = 'u8[262144]{0}', space=vmem, size = 0x40000, scoped, tag = 'input window, operand 3, single buffered']
    #allocation8 [shape = 'u8[8192]{0}', space=vmem, size = 0x2000, scoped, tag = 'input window, operand 5, single buffered']
    #allocation9 [shape = 's32[1]{0}', space=sflag, size = 0x4, scoped, tag = 'scoped memory for tpu_custom_call.1']
    #allocation10 [shape = 'u8[16384]{0}', space=vmem, size = 0x4000, scoped, tag = 'output window, operand 0']
    %11 = vsyncpa [#allocation3], 0
    %s12 = scalar_lea.sflag [#allocation3], 1
    %13 = vsyncpa %s12, 0
    %14 = vsyncpa [#allocation6], 0
    %15 = vsyncpa [#allocation9], 0
    %16 = vsyncpa [#allocation4], 0
    %s17 = scalar_lea.sflag [#allocation4], 1
    %18 = vsyncpa %s17, 0
    loop: start=0, step=1, limit=4
    $region2: #{tpu_custom_call.1} parent=1 // loop_pre_header
      _
    $region3: #{tpu_custom_call.1} parent=1 // loop_header
      %s20 = sphi 0, %s24
      %p21 = scmp.ge.s32.totalorder %s20, 4
      %s30 = sphi 0, %s32
      %s33 = sphi 0, %s30
      %s34 = sphi 0, %s33
      %s50 = sphi 0, %s34
      %s54 = sphi 0, %s54
      %s56 = sphi 0, %s54
      %s57 = sphi 0, %s56
      %s71 = sphi 0, %s57
      %s75 = sphi 0, %s75
      %s77 = sphi 0, %s75
      %s78 = sphi 0, %s77
      %s92 = sphi 0, %s78
      %s96 = sphi 0, %s96
      %s98 = sphi 0, %s96
      %s99 = sphi 0, %s98
      %s113 = sphi 0, %s99
      %s117 = sphi 0, %s117
      %s119 = sphi 0, %s117
      %s120 = sphi 0, %s119
      %s134 = sphi 0, %s120
      %s138 = sphi 0, %s138
      %s140 = sphi 0, %s138
      %s141 = sphi 0, %s140
      %s155 = sphi 0, %s141
      %s161 = sphi 0, %s163
      %s164 = sphi 0, %s161
      %s165 = sphi 0, %s164
      %s181 = sphi 0, %s165
    $region4: #{tpu_custom_call.1} parent=1 // loop_header_branch
      %23 = sbr.rel (%p21) target = $region8
    $region5: #{tpu_custom_call.1} parent=1 // loop_body
      %s25 = ssub.s32 %s20, 1
      %s26 = ssub.s32 %s20, 2
      %s27 = sadd.s32 %s20, 1
      %s28 = ssub.s32 %s20, %s27
      %p29 = scmp.eq.s32.totalorder %s28, 0
      %s31 = sadd.s32 %s30, 1
      %s32 = scalar_select %p29, %s30, %s31
      %p35 = pneg %p29
      %p36 = scmp.eq.s32.totalorder %s20, 1
      %p37 = por %p35, %p36
      %p38 = scmp.ne.s32.totalorder %s30, %s33
      %p39 = scmp.eq.s32.totalorder %s20, 0
      %p40 = por %p38, %p39
      %p41 = scmp.ne.s32.totalorder %s30, %s33
      %p42 = scmp.eq.s32.totalorder %s25, 1
      %p43 = por %p41, %p42
      %p44 = scmp.ne.s32.totalorder %s33, %s34
      %p45 = scmp.eq.s32.totalorder %s25, 0
      %p46 = por %p44, %p45
      %p47 = scmp.ne.s32.totalorder %s33, %s34
      %p48 = scmp.eq.s32.totalorder %s26, 1
      %p49 = por %p47, %p48
      %p51 = scmp.ne.s32.totalorder %s34, %s50
      %p52 = scmp.eq.s32.totalorder %s26, 0
      %p53 = por %p51, %p52
      %s55 = sadd.s32 %s54, 1
      %p58 = scmp.eq.s32.totalorder %s20, 1
      %p59 = scmp.ne.s32.totalorder %s54, %s56
      %p60 = scmp.eq.s32.totalorder %s20, 0
      %p61 = por %p59, %p60
      %p62 = scmp.ne.s32.totalorder %s54, %s56
      %p63 = scmp.eq.s32.totalorder %s25, 1
      %p64 = por %p62, %p63
      %p65 = scmp.ne.s32.totalorder %s56, %s57
      %p66 = scmp.eq.s32.totalorder %s25, 0
      %p67 = por %p65, %p66
      %p68 = scmp.ne.s32.totalorder %s56, %s57
      %p69 = scmp.eq.s32.totalorder %s26, 1
      %p70 = por %p68, %p69
      %p72 = scmp.ne.s32.totalorder %s57, %s71
      %p73 = scmp.eq.s32.totalorder %s26, 0
      %p74 = por %p72, %p73
      %s76 = sadd.s32 %s75, 1
      %p79 = scmp.eq.s32.totalorder %s20, 1
      %p80 = scmp.ne.s32.totalorder %s75, %s77
      %p81 = scmp.eq.s32.totalorder %s20, 0
      %p82 = por %p80, %p81
      %p83 = scmp.ne.s32.totalorder %s75, %s77
      %p84 = scmp.eq.s32.totalorder %s25, 1
      %p85 = por %p83, %p84
      %p86 = scmp.ne.s32.totalorder %s77, %s78
      %p87 = scmp.eq.s32.totalorder %s25, 0
      %p88 = por %p86, %p87
      %p89 = scmp.ne.s32.totalorder %s77, %s78
      %p90 = scmp.eq.s32.totalorder %s26, 1
      %p91 = por %p89, %p90
      %p93 = scmp.ne.s32.totalorder %s78, %s92
      %p94 = scmp.eq.s32.totalorder %s26, 0
      %p95 = por %p93, %p94
      %s97 = sadd.s32 %s96, 1
      %p100 = scmp.eq.s32.totalorder %s20, 1
      %p101 = scmp.ne.s32.totalorder %s96, %s98
      %p102 = scmp.eq.s32.totalorder %s20, 0
      %p103 = por %p101, %p102
      %p104 = scmp.ne.s32.totalorder %s96, %s98
      %p105 = scmp.eq.s32.totalorder %s25, 1
      %p106 = por %p104, %p105
      %p107 = scmp.ne.s32.totalorder %s98, %s99
      %p108 = scmp.eq.s32.totalorder %s25, 0
      %p109 = por %p107, %p108
      %p110 = scmp.ne.s32.totalorder %s98, %s99
      %p111 = scmp.eq.s32.totalorder %s26, 1
      %p112 = por %p110, %p111
      %p114 = scmp.ne.s32.totalorder %s99, %s113
      %p115 = scmp.eq.s32.totalorder %s26, 0
      %p116 = por %p114, %p115
      %s118 = sadd.s32 %s117, 1
      %p121 = scmp.eq.s32.totalorder %s20, 1
      %p122 = scmp.ne.s32.totalorder %s117, %s119
      %p123 = scmp.eq.s32.totalorder %s20, 0
      %p124 = por %p122, %p123
      %p125 = scmp.ne.s32.totalorder %s117, %s119
      %p126 = scmp.eq.s32.totalorder %s25, 1
      %p127 = por %p125, %p126
      %p128 = scmp.ne.s32.totalorder %s119, %s120
      %p129 = scmp.eq.s32.totalorder %s25, 0
      %p130 = por %p128, %p129
      %p131 = scmp.ne.s32.totalorder %s119, %s120
      %p132 = scmp.eq.s32.totalorder %s26, 1
      %p133 = por %p131, %p132
      %p135 = scmp.ne.s32.totalorder %s120, %s134
      %p136 = scmp.eq.s32.totalorder %s26, 0
      %p137 = por %p135, %p136
      %s139 = sadd.s32 %s138, 1
      %p142 = scmp.eq.s32.totalorder %s20, 1
      %p143 = scmp.ne.s32.totalorder %s138, %s140
      %p144 = scmp.eq.s32.totalorder %s20, 0
      %p145 = por %p143, %p144
      %p146 = scmp.ne.s32.totalorder %s138, %s140
      %p147 = scmp.eq.s32.totalorder %s25, 1
      %p148 = por %p146, %p147
      %p149 = scmp.ne.s32.totalorder %s140, %s141
      %p150 = scmp.eq.s32.totalorder %s25, 0
      %p151 = por %p149, %p150
      %p152 = scmp.ne.s32.totalorder %s140, %s141
      %p153 = scmp.eq.s32.totalorder %s26, 1
      %p154 = por %p152, %p153
      %p156 = scmp.ne.s32.totalorder %s141, %s155
      %p157 = scmp.eq.s32.totalorder %s26, 0
      %p158 = por %p156, %p157
      %s159 = ssub.s32 %s20, %s27
      %p160 = scmp.eq.s32.totalorder %s159, 0
      %s162 = sadd.s32 %s161, 1
      %s163 = scalar_select %p160, %s161, %s162
      %p166 = pneg %p160
      %p167 = scmp.eq.s32.totalorder %s20, 1
      %p168 = por %p166, %p167
      %p169 = scmp.ne.s32.totalorder %s161, %s164
      %p170 = scmp.eq.s32.totalorder %s20, 0
      %p171 = por %p169, %p170
      %p172 = scmp.ne.s32.totalorder %s161, %s164
      %p173 = scmp.eq.s32.totalorder %s25, 1
      %p174 = por %p172, %p173
      %p175 = scmp.ne.s32.totalorder %s164, %s165
      %p176 = scmp.eq.s32.totalorder %s25, 0
      %p177 = por %p175, %p176
      %p178 = scmp.ne.s32.totalorder %s164, %s165
      %p179 = scmp.eq.s32.totalorder %s26, 1
      %p180 = por %p178, %p179
      %p182 = scmp.ne.s32.totalorder %s165, %s181
      %p183 = scmp.eq.s32.totalorder %s26, 0
      %p184 = por %p182, %p183
      %p185 = scmp.le.s32.totalorder 1, %s20
      %p186 = scmp.lt.s32.totalorder %s20, 3
      %p187 = pnand %p185, %p186
      %p188 = pneg %p187
      // Predicated region
      $region9: #{tpu_custom_call.1} parent=5 // pred_check
        _
      $region10: #{tpu_custom_call.1} parent=5 // pred_check_branch
        %190 = sbr.rel (%p187) target = $region12
      $region11: #{tpu_custom_call.1} parent=5 // pred_region
        %s191 = ssub.s32 %s20, 1
        // Predicated region
        $region13: #{tpu_custom_call.1} parent=11 // pred_check
          %p192 = pneg %p67
        $region14: #{tpu_custom_call.1} parent=11 // pred_check_branch
          %194 = sbr.rel (%p192) target = $region16
        $region15: #{tpu_custom_call.1} parent=11 // pred_region
          _
        $region16: #{tpu_custom_call.1} parent=11 // pred_fallthru
          _
        // Predicated region
        $region17: #{tpu_custom_call.1} parent=11 // pred_check
          %p195 = pneg %p88
        $region18: #{tpu_custom_call.1} parent=11 // pred_check_branch
          %197 = sbr.rel (%p195) target = $region20
        $region19: #{tpu_custom_call.1} parent=11 // pred_region
          %s199 = ssub.s32 8192, 8192
          %200 = vsyncadd [#allocation6], %s199
          %s201 = sshll.u32 [#allocation5], 4
          %s202 = int_to_ptr.vmem [resolvable:$true] %s201
          %207 = dma.hbm_to_vmem [thread:$0]  %s2, 8192, %s202, [#allocation6], 256, 256, 16
        $region20: #{tpu_custom_call.1} parent=11 // pred_fallthru
          _
        // Predicated region
        $region21: #{tpu_custom_call.1} parent=11 // pred_check
          %p208 = pneg %p109
        $region22: #{tpu_custom_call.1} parent=11 // pred_check_branch
          %210 = sbr.rel (%p208) target = $region24
        $region23: #{tpu_custom_call.1} parent=11 // pred_region
          %s212 = ssub.s32 8192, 8192
          %213 = vsyncadd [#allocation6], %s212
          %s214 = sshll.u32 [#allocation7], 4
          %s215 = int_to_ptr.vmem [resolvable:$true] %s214
          %220 = dma.hbm_to_vmem [thread:$0]  %s3, 8192, %s215, [#allocation6], 256, 256, 16
        $region24: #{tpu_custom_call.1} parent=11 // pred_fallthru
          _
        // Predicated region
        $region25: #{tpu_custom_call.1} parent=11 // pred_check
          %p221 = pneg %p130
        $region26: #{tpu_custom_call.1} parent=11 // pred_check_branch
          %223 = sbr.rel (%p221) target = $region28
        $region27: #{tpu_custom_call.1} parent=11 // pred_region
          _
        $region28: #{tpu_custom_call.1} parent=11 // pred_fallthru
          _
        // Predicated region
        $region29: #{tpu_custom_call.1} parent=11 // pred_check
          %p224 = pneg %p151
        $region30: #{tpu_custom_call.1} parent=11 // pred_check_branch
          %226 = sbr.rel (%p224) target = $region32
        $region31: #{tpu_custom_call.1} parent=11 // pred_region
          %s228 = ssub.s32 256, 256
          %229 = vsyncadd [#allocation9], %s228
          %s231 = sshll.u32 [#allocation8], 4
          %s232 = int_to_ptr.vmem [resolvable:$true] %s231
          %234 = dma.hbm_to_vmem [thread:$0]  %s5, 256, %s232, [#allocation9]
        $region32: #{tpu_custom_call.1} parent=11 // pred_fallthru
          _
      $region12: #{tpu_custom_call.1} parent=5 // pred_fallthru
        _
      %p235 = scmp.lt.s32.totalorder %s20, 2
      // Predicated region
      $region33: #{tpu_custom_call.1} parent=5 // pred_check
        %p236 = pneg %p235
      $region34: #{tpu_custom_call.1} parent=5 // pred_check_branch
        %238 = sbr.rel (%p236) target = $region36
      $region35: #{tpu_custom_call.1} parent=5 // pred_region
        // Predicated region
        $region37: #{tpu_custom_call.1} parent=35 // pred_check
          %p239 = pneg %p40
        $region38: #{tpu_custom_call.1} parent=35 // pred_check_branch
          %241 = sbr.rel (%p239) target = $region40
        $region39: #{tpu_custom_call.1} parent=35 // pred_region
          %s242 = sand.u32 %s30, 1
          %s243 = scalar_lea.sflag [#allocation3], %s242
          %s244 = sand.u32 %s30, 1
          %s245 = smul.addr %s244, 16
          %s246 = scalar_lea.vmem [#allocation2], %s245
          %s247 = smul.u32 2, %s20
          %s249 = ssub.s32 256, 256
          %250 = vsyncadd %s243, %s249
          %s251 = smul.addr %s247, 2
          %s252 = smul.addr %s251, 64
          %s253 = scalar_lea.hbm %s0, %s252
          %s254 = sshll.u32 %s246, 4
          %s255 = int_to_ptr.vmem [resolvable:$true] %s254
          %260 = dma.hbm_to_vmem [thread:$0]  %s253, 256, %s255, %s243, 128, 128, 8
        $region40: #{tpu_custom_call.1} parent=35 // pred_fallthru
          _
      $region36: #{tpu_custom_call.1} parent=5 // pred_fallthru
        _
      %p261 = scmp.le.s32.totalorder 1, %s20
      %p262 = scmp.lt.s32.totalorder %s20, 3
      %p263 = pnand %p261, %p262
      %p264 = pneg %p263
      // Predicated region
      $region41: #{tpu_custom_call.1} parent=5 // pred_check
        _
      $region42: #{tpu_custom_call.1} parent=5 // pred_check_branch
        %266 = sbr.rel (%p263) target = $region44
      $region43: #{tpu_custom_call.1} parent=5 // pred_region
        %s267 = ssub.s32 %s20, 1
        %s268 = sand.u32 %s33, 1
        %s269 = scalar_lea.sflag [#allocation3], %s268
        %s270 = sand.u32 %s33, 1
        %s271 = smul.addr %s270, 16
        %s272 = scalar_lea.vmem [#allocation2], %s271
        // Predicated region
        $region45: #{tpu_custom_call.1} parent=43 // pred_check
          %p273 = pneg %p46
        $region46: #{tpu_custom_call.1} parent=43 // pred_check_branch
          %275 = sbr.rel (%p273) target = $region48
        $region47: #{tpu_custom_call.1} parent=43 // pred_region
          %276 = dma.done %s269, 256
        $region48: #{tpu_custom_call.1} parent=43 // pred_fallthru
          _
        // Predicated region
        $region49: #{tpu_custom_call.1} parent=43 // pred_check
          %p277 = pneg %p88
        $region50: #{tpu_custom_call.1} parent=43 // pred_check_branch
          %279 = sbr.rel (%p277) target = $region52
        $region51: #{tpu_custom_call.1} parent=43 // pred_region
          %280 = dma.done [#allocation6], 8192
        $region52: #{tpu_custom_call.1} parent=43 // pred_fallthru
          _
        // Predicated region
        $region53: #{tpu_custom_call.1} parent=43 // pred_check
          %p281 = pneg %p109
        $region54: #{tpu_custom_call.1} parent=43 // pred_check_branch
          %283 = sbr.rel (%p281) target = $region56
        $region55: #{tpu_custom_call.1} parent=43 // pred_region
          %284 = dma.done [#allocation6], 8192
        $region56: #{tpu_custom_call.1} parent=43 // pred_fallthru
          _
        // Predicated region
        $region57: #{tpu_custom_call.1} parent=43 // pred_check
          %p285 = pneg %p151
        $region58: #{tpu_custom_call.1} parent=43 // pred_check_branch
          %287 = sbr.rel (%p285) target = $region60
        $region59: #{tpu_custom_call.1} parent=43 // pred_region
          %288 = dma.done [#allocation9], 256
        $region60: #{tpu_custom_call.1} parent=43 // pred_fallthru
          _
        %s289 = sand.u32 %s33, 1
        %s290 = scalar_lea.sflag [#allocation3], %s289
        %s291 = sand.u32 %s33, 1
        %s292 = smul.addr %s291, 16
        %s293 = scalar_lea.vmem [#allocation2], %s292
        %p294 = pneg %p46
        %p295 = pneg %p43
        %p296 = pneg %p67
        %p297 = pneg %p64
        %p298 = pneg %p88
        %p299 = pneg %p85
        %p300 = pneg %p109
        %p301 = pneg %p106
        %p302 = pneg %p130
        %p303 = pneg %p127
        %p304 = pneg %p151
        %p305 = pneg %p148
        %p306 = pneg %p177
        %p307 = pneg %p174
        %s308 = sand.u32 %s164, 1
        %s309 = scalar_lea.sflag [#allocation4], %s308
        %s310 = sand.u32 %s164, 1
        %s311 = smul.addr %s310, 16
        %s312 = scalar_lea.vmem [#allocation10], %s311
        %s313 = smul.u32 2, %s25
        %s314 = smul.u32 2, %s25
        %v315 = vld [vmem:[%s272] sm:$0xff]
        %v316 = vld [vmem:[%s272 + $0x8] sm:$0xff]
        %v317 = vld [vmem:[#allocation5] sm:$0xff]
        %v318 = vld [vmem:[#allocation5 + $0x8] sm:$0xff]
        %v319 = vld [vmem:[#allocation5 + $0x10] sm:$0xff]
        %v320 = vld [vmem:[#allocation5 + $0x18] sm:$0xff]
        %v321 = vld [vmem:[#allocation5 + $0x20] sm:$0xff]
        %v322 = vld [vmem:[#allocation5 + $0x28] sm:$0xff]
        %v323 = vld [vmem:[#allocation5 + $0x30] sm:$0xff]
        %v324 = vld [vmem:[#allocation5 + $0x38] sm:$0xff]
        %v325 = vld [vmem:[#allocation5 + $0x40] sm:$0xff]
        %v326 = vld [vmem:[#allocation5 + $0x48] sm:$0xff]
        %v327 = vld [vmem:[#allocation5 + $0x50] sm:$0xff]
        %v328 = vld [vmem:[#allocation5 + $0x58] sm:$0xff]
        %v329 = vld [vmem:[#allocation5 + $0x60] sm:$0xff]
        %v330 = vld [vmem:[#allocation5 + $0x68] sm:$0xff]
        %v331 = vld [vmem:[#allocation5 + $0x70] sm:$0xff]
        %v332 = vld [vmem:[#allocation5 + $0x78] sm:$0xff]
        %v333 = vld [vmem:[#allocation5 + $0x80] sm:$0xff]
        %v334 = vld [vmem:[#allocation5 + $0x88] sm:$0xff]
        %v335 = vld [vmem:[#allocation5 + $0x90] sm:$0xff]
        %v336 = vld [vmem:[#allocation5 + $0x98] sm:$0xff]
        %v337 = vld [vmem:[#allocation5 + $0xa0] sm:$0xff]
        %v338 = vld [vmem:[#allocation5 + $0xa8] sm:$0xff]
        %v339 = vld [vmem:[#allocation5 + $0xb0] sm:$0xff]
        %v340 = vld [vmem:[#allocation5 + $0xb8] sm:$0xff]
        %v341 = vld [vmem:[#allocation5 + $0xc0] sm:$0xff]
        %v342 = vld [vmem:[#allocation5 + $0xc8] sm:$0xff]
        %v343 = vld [vmem:[#allocation5 + $0xd0] sm:$0xff]
        %v344 = vld [vmem:[#allocation5 + $0xd8] sm:$0xff]
        %v345 = vld [vmem:[#allocation5 + $0xe0] sm:$0xff]
        %v346 = vld [vmem:[#allocation5 + $0xe8] sm:$0xff]
        %v347 = vld [vmem:[#allocation5 + $0xf0] sm:$0xff]
        %v348 = vld [vmem:[#allocation5 + $0xf8] sm:$0xff]
        %v349 = vld [vmem:[#allocation5 + $0x100] sm:$0xff]
        %v350 = vld [vmem:[#allocation5 + $0x108] sm:$0xff]
        %v351 = vld [vmem:[#allocation5 + $0x110] sm:$0xff]
        %v352 = vld [vmem:[#allocation5 + $0x118] sm:$0xff]
        %v353 = vld [vmem:[#allocation5 + $0x120] sm:$0xff]
        %v354 = vld [vmem:[#allocation5 + $0x128] sm:$0xff]
        %v355 = vld [vmem:[#allocation5 + $0x130] sm:$0xff]
        %v356 = vld [vmem:[#allocation5 + $0x138] sm:$0xff]
        %v357 = vld [vmem:[#allocation5 + $0x140] sm:$0xff]
        %v358 = vld [vmem:[#allocation5 + $0x148] sm:$0xff]
        %v359 = vld [vmem:[#allocation5 + $0x150] sm:$0xff]
        %v360 = vld [vmem:[#allocation5 + $0x158] sm:$0xff]
        %v361 = vld [vmem:[#allocation5 + $0x160] sm:$0xff]
        %v362 = vld [vmem:[#allocation5 + $0x168] sm:$0xff]
        %v363 = vld [vmem:[#allocation5 + $0x170] sm:$0xff]
        %v364 = vld [vmem:[#allocation5 + $0x178] sm:$0xff]
        %v365 = vld [vmem:[#allocation5 + $0x180] sm:$0xff]
        %v366 = vld [vmem:[#allocation5 + $0x188] sm:$0xff]
        %v367 = vld [vmem:[#allocation5 + $0x190] sm:$0xff]
        %v368 = vld [vmem:[#allocation5 + $0x198] sm:$0xff]
        %v369 = vld [vmem:[#allocation5 + $0x1a0] sm:$0xff]
        %v370 = vld [vmem:[#allocation5 + $0x1a8] sm:$0xff]
        %v371 = vld [vmem:[#allocation5 + $0x1b0] sm:$0xff]
        %v372 = vld [vmem:[#allocation5 + $0x1b8] sm:$0xff]
        %v373 = vld [vmem:[#allocation5 + $0x1c0] sm:$0xff]
        %v374 = vld [vmem:[#allocation5 + $0x1c8] sm:$0xff]
        %v375 = vld [vmem:[#allocation5 + $0x1d0] sm:$0xff]
        %v376 = vld [vmem:[#allocation5 + $0x1d8] sm:$0xff]
        %v377 = vld [vmem:[#allocation5 + $0x1e0] sm:$0xff]
        %v378 = vld [vmem:[#allocation5 + $0x1e8] sm:$0xff]
        %v379 = vld [vmem:[#allocation5 + $0x1f0] sm:$0xff]
        %v380 = vld [vmem:[#allocation5 + $0x1f8] sm:$0xff]
        %v383 = vcombine.low %v315, %v316
        %v384 = vcombine.high %v315, %v316
        %387 = vmatprep.subr.mxu0 %v348
        %388 = vmatpush1.msra.mxu0 %v347
        %389 = vmatprep.subr.mxu0 %v346
        %390 = vmatpush1.msra.mxu0 %v345
        %391 = vmatprep.subr.mxu0 %v344
        %392 = vmatpush1.msra.mxu0 %v343
        %393 = vmatprep.subr.mxu0 %v342
        %394 = vmatpush1.msra.mxu0 %v341
        %395 = vmatprep.subr.mxu0 %v340
        %396 = vmatpush1.msra.mxu0 %v339
        %397 = vmatprep.subr.mxu0 %v338
        %398 = vmatpush1.msra.mxu0 %v337
        %399 = vmatprep.subr.mxu0 %v336
        %400 = vmatpush1.msra.mxu0 %v335
        %401 = vmatprep.subr.mxu0 %v334
        %402 = vmatpush1.msra.mxu0 %v333
        %403 = vmatprep.subr.mxu0 %v332
        %404 = vmatpush1.msra.mxu0 %v331
        %405 = vmatprep.subr.mxu0 %v330
        %406 = vmatpush1.msra.mxu0 %v329
        %407 = vmatprep.subr.mxu0 %v328
        %408 = vmatpush1.msra.mxu0 %v327
        %409 = vmatprep.subr.mxu0 %v326
        %410 = vmatpush1.msra.mxu0 %v325
        %411 = vmatprep.subr.mxu0 %v324
        %412 = vmatpush1.msra.mxu0 %v323
        %413 = vmatprep.subr.mxu0 %v322
        %414 = vmatpush1.msra.mxu0 %v321
        %415 = vmatprep.subr.mxu0 %v320
        %416 = vmatpush1.msra.mxu0 %v319
        %417 = vmatprep.subr.mxu0 %v318
        %418 = vmatpush1.msra.mxu0 %v317
        %419 = vmatprep.subr.mxu0 %v380
        %420 = vmatpush2.msra.mxu0 %v379
        %421 = vmatprep.subr.mxu0 %v378
        %422 = vmatpush2.msra.mxu0 %v377
        %423 = vmatprep.subr.mxu0 %v376
        %424 = vmatpush2.msra.mxu0 %v375
        %425 = vmatprep.subr.mxu0 %v374
        %426 = vmatpush2.msra.mxu0 %v373
        %427 = vmatprep.subr.mxu0 %v372
        %428 = vmatpush2.msra.mxu0 %v371
        %429 = vmatprep.subr.mxu0 %v370
        %430 = vmatpush2.msra.mxu0 %v369
        %431 = vmatprep.subr.mxu0 %v368
        %432 = vmatpush2.msra.mxu0 %v367
        %433 = vmatprep.subr.mxu0 %v366
        %434 = vmatpush2.msra.mxu0 %v365
        %435 = vmatprep.subr.mxu0 %v364
        %436 = vmatpush2.msra.mxu0 %v363
        %437 = vmatprep.subr.mxu0 %v362
        %438 = vmatpush2.msra.mxu0 %v361
        %439 = vmatprep.subr.mxu0 %v360
        %440 = vmatpush2.msra.mxu0 %v359
        %441 = vmatprep.subr.mxu0 %v358
        %442 = vmatpush2.msra.mxu0 %v357
        %443 = vmatprep.subr.mxu0 %v356
        %444 = vmatpush2.msra.mxu0 %v355
        %445 = vmatprep.subr.mxu0 %v354
        %446 = vmatpush2.msra.mxu0 %v353
        %447 = vmatprep.subr.mxu0 %v352
        %448 = vmatpush2.msra.mxu0 %v351
        %449 = vmatprep.subr.mxu0 %v350
        %450 = vmatpush2.msra.mxu0 %v349
        %451 = vmatprep.mubr.f32.mxu0 %v384
        %452 = vmatmul.mubr.f32.gmra.mxu0 %v383
        %v453 = vpop.f32.mrf.mxu0
        %v454 = vadd.f32 0.0, %v453
        %v455 = vpop.f32.mrf.mxu0
        %v456 = vadd.f32 0.0, %v455
        %457 = vdwg.mxu0
        %v460 = vcombine.low %v454, %v456
        %v461 = vcombine.high %v454, %v456
        %v462 = vld [vmem:[%s1] sm:$0xff]
        %v463 = vcombine.high %v460, %v460
        %vm464 = vcmask 31744
        %v466 = vsel %vm464, %v462, 0
        %vm468 = vcmask 1043456
        %v469 = vsel %vm468, %v460, 0
        %v471 = vsel %vm468, %v463, 0
        %473 = vmatprep.subr.mxu0 0.0
        %474 = vmatpush1.msra.mxu0 0.0
        %475 = vmatprep.subr.mxu0 0.0
        %476 = vmatpush1.msra.mxu0 0.0
        %477 = vmatprep.subr.mxu0 0.0
        %478 = vmatpush1.msra.mxu0 0.0
        %479 = vmatprep.subr.mxu0 0.0
        %480 = vmatpush1.msra.mxu0 0.0
        %481 = vmatprep.subr.mxu0 0.0
        %482 = vmatpush1.msra.mxu0 0.0
        %483 = vmatprep.subr.mxu0 0.0
        %484 = vmatpush1.msra.mxu0 0.0
        %485 = vmatprep.subr.mxu0 0.0
        %486 = vmatpush1.msra.mxu0 0.0
        %487 = vmatprep.subr.mxu0 0.0
        %488 = vmatpush1.msra.mxu0 0.0
        %489 = vmatprep.subr.mxu0 0.0
        %490 = vmatpush1.msra.mxu0 0.0
        %491 = vmatprep.subr.mxu0 0.0
        %492 = vmatpush1.msra.mxu0 0.0
        %493 = vmatprep.subr.mxu0 0.0
        %494 = vmatpush1.msra.mxu0 0.0
        %495 = vmatprep.subr.mxu0 0.0
        %496 = vmatpush1.msra.mxu0 0.0
        %497 = vmatprep.subr.mxu0 0.0
        %498 = vmatpush1.msra.mxu0 0.0
        %499 = vmatprep.subr.mxu0 0.0
        %500 = vmatpush1.msra.mxu0 0.0
        %501 = vmatprep.subr.mxu0 0.0
        %502 = vmatpush1.msra.mxu0 0.0
        %503 = vmatprep.subr.mxu0 %v471
        %504 = vmatpush1.msra.mxu0 %v469
        %505 = vmatprep.subr.mxu0 0.0
        %506 = vmatpush2.msra.mxu0 0.0
        %507 = vmatprep.subr.mxu0 0.0
        %508 = vmatpush2.msra.mxu0 0.0
        %509 = vmatprep.subr.mxu0 0.0
        %510 = vmatpush2.msra.mxu0 0.0
        %511 = vmatprep.subr.mxu0 0.0
        %512 = vmatpush2.msra.mxu0 0.0
        %513 = vmatprep.subr.mxu0 0.0
        %514 = vmatpush2.msra.mxu0 0.0
        %515 = vmatprep.subr.mxu0 0.0
        %516 = vmatpush2.msra.mxu0 0.0
        %517 = vmatprep.subr.mxu0 0.0
        %518 = vmatpush2.msra.mxu0 0.0
        %519 = vmatprep.subr.mxu0 0.0
        %520 = vmatpush2.msra.mxu0 0.0
        %521 = vmatprep.subr.mxu0 0.0
        %522 = vmatpush2.msra.mxu0 0.0
        %523 = vmatprep.subr.mxu0 0.0
        %524 = vmatpush2.msra.mxu0 0.0
        %525 = vmatprep.subr.mxu0 0.0
        %526 = vmatpush2.msra.mxu0 0.0
        %527 = vmatprep.subr.mxu0 0.0
        %528 = vmatpush2.msra.mxu0 0.0
        %529 = vmatprep.subr.mxu0 0.0
        %530 = vmatpush2.msra.mxu0 0.0
        %531 = vmatprep.subr.mxu0 0.0
        %532 = vmatpush2.msra.mxu0 0.0
        %533 = vmatprep.subr.mxu0 0.0
        %534 = vmatpush2.msra.mxu0 0.0
        %535 = vmatprep.subr.mxu0 0.0
        %536 = vmatpush2.msra.mxu0 0.0
        %537 = vmatprep.mubr.f32.mxu0 0.0
        %538 = vmatmul.mubr.f32.gmra.mxu0 %v466
        %v539 = vpop.f32.mrf.mxu0
        %v540 = vadd.f32 0.0, %v539
        %v541 = vpop.f32.mrf.mxu0
        %v542 = vadd.f32 0.0, %v541
        %543 = vdwg.mxu0
        %v544 = vcombine.high %v461, %v461
        %v545 = vsel %vm468, %v461, 0
        %v547 = vsel %vm468, %v544, 0
        %549 = vmatprep.subr.mxu0 0.0
        %550 = vmatpush1.msra.mxu0 0.0
        %551 = vmatprep.subr.mxu0 0.0
        %552 = vmatpush1.msra.mxu0 0.0
        %553 = vmatprep.subr.mxu0 0.0
        %554 = vmatpush1.msra.mxu0 0.0
        %555 = vmatprep.subr.mxu0 0.0
        %556 = vmatpush1.msra.mxu0 0.0
        %557 = vmatprep.subr.mxu0 0.0
        %558 = vmatpush1.msra.mxu0 0.0
        %559 = vmatprep.subr.mxu0 0.0
        %560 = vmatpush1.msra.mxu0 0.0
        %561 = vmatprep.subr.mxu0 0.0
        %562 = vmatpush1.msra.mxu0 0.0
        %563 = vmatprep.subr.mxu0 0.0
        %564 = vmatpush1.msra.mxu0 0.0
        %565 = vmatprep.subr.mxu0 0.0
        %566 = vmatpush1.msra.mxu0 0.0
        %567 = vmatprep.subr.mxu0 0.0
        %568 = vmatpush1.msra.mxu0 0.0
        %569 = vmatprep.subr.mxu0 0.0
        %570 = vmatpush1.msra.mxu0 0.0
        %571 = vmatprep.subr.mxu0 0.0
        %572 = vmatpush1.msra.mxu0 0.0
        %573 = vmatprep.subr.mxu0 0.0
        %574 = vmatpush1.msra.mxu0 0.0
        %575 = vmatprep.subr.mxu0 0.0
        %576 = vmatpush1.msra.mxu0 0.0
        %577 = vmatprep.subr.mxu0 0.0
        %578 = vmatpush1.msra.mxu0 0.0
        %579 = vmatprep.subr.mxu0 %v547
        %580 = vmatpush1.msra.mxu0 %v545
        %581 = vmatprep.subr.mxu0 0.0
        %582 = vmatpush2.msra.mxu0 0.0
        %583 = vmatprep.subr.mxu0 0.0
        %584 = vmatpush2.msra.mxu0 0.0
        %585 = vmatprep.subr.mxu0 0.0
        %586 = vmatpush2.msra.mxu0 0.0
        %587 = vmatprep.subr.mxu0 0.0
        %588 = vmatpush2.msra.mxu0 0.0
        %589 = vmatprep.subr.mxu0 0.0
        %590 = vmatpush2.msra.mxu0 0.0
        %591 = vmatprep.subr.mxu0 0.0
        %592 = vmatpush2.msra.mxu0 0.0
        %593 = vmatprep.subr.mxu0 0.0
        %594 = vmatpush2.msra.mxu0 0.0
        %595 = vmatprep.subr.mxu0 0.0
        %596 = vmatpush2.msra.mxu0 0.0
        %597 = vmatprep.subr.mxu0 0.0
        %598 = vmatpush2.msra.mxu0 0.0
        %599 = vmatprep.subr.mxu0 0.0
        %600 = vmatpush2.msra.mxu0 0.0
        %601 = vmatprep.subr.mxu0 0.0
        %602 = vmatpush2.msra.mxu0 0.0
        %603 = vmatprep.subr.mxu0 0.0
        %604 = vmatpush2.msra.mxu0 0.0
        %605 = vmatprep.subr.mxu0 0.0
        %606 = vmatpush2.msra.mxu0 0.0
        %607 = vmatprep.subr.mxu0 0.0
        %608 = vmatpush2.msra.mxu0 0.0
        %609 = vmatprep.subr.mxu0 0.0
        %610 = vmatpush2.msra.mxu0 0.0
        %611 = vmatprep.subr.mxu0 0.0
        %612 = vmatpush2.msra.mxu0 0.0
        %613 = vmatprep.mubr.f32.mxu0 0.0
        %614 = vmatmul.mubr.f32.gmra.mxu0 %v466
        %v615 = vpop.f32.mrf.mxu0
        %v616 = vadd.f32 0.0, %v615
        %v617 = vpop.f32.mrf.mxu0
        %v618 = vadd.f32 0.0, %v617
        %619 = vdwg.mxu0
        %v620 = vld [vmem:[%s4] sm:$0xff]
        %v621 = vld [vmem:[%s4 + $0x8] sm:$0xff]
        %v622 = vmul.f32 %v540, %v620
        %v623 = vmul.f32 %v542, %v621
        %v624 = vmul.f32 %v616, %v620
        %v625 = vmul.f32 %v618, %v621
        %v626 = vld [vmem:[#allocation8] sm:$0xff]
        %v627 = vld [vmem:[#allocation8 + $0x8] sm:$0xff]
        %v628 = vsub.f32 %v622, %v626
        %v629 = vsub.f32 %v623, %v627
        %v630 = vsub.f32 %v624, %v626
        %v631 = vsub.f32 %v625, %v627
        %v632 = vmax.f32 %v628, 0.0
        %v633 = vmax.f32 %v629, 0.0
        %v634 = vmax.f32 %v630, 0.0
        %v635 = vmax.f32 %v631, 0.0
        %v636 = vsub.f32 0.0, %v622
        %v637 = vsub.f32 0.0, %v623
        %v638 = vsub.f32 0.0, %v624
        %v639 = vsub.f32 0.0, %v625
        %v640 = vsub.f32 %v636, %v626
        %v641 = vsub.f32 %v637, %v627
        %v642 = vsub.f32 %v638, %v626
        %v643 = vsub.f32 %v639, %v627
        %v644 = vmax.f32 %v640, 0.0
        %v645 = vmax.f32 %v641, 0.0
        %v646 = vmax.f32 %v642, 0.0
        %v647 = vmax.f32 %v643, 0.0
        %v648 = vsub.f32 %v632, %v644
        %v649 = vsub.f32 %v633, %v645
        %v650 = vsub.f32 %v634, %v646
        %v651 = vsub.f32 %v635, %v647
        %v656 = vrot.slane %v648, 4
        %v657 = vrot.slane %v649, 4
        %v658 = vrot.slane %v650, 4
        %v659 = vrot.slane %v651, 4
        %v664 = vadd.f32 %v648, %v656
        %v665 = vadd.f32 %v649, %v657
        %v666 = vadd.f32 %v650, %v658
        %v667 = vadd.f32 %v651, %v659
        %v672 = vcombine.low %v664, %v665
        %v673 = vcombine.low %v666, %v667
        %v674 = vld [vmem:[#allocation7] sm:$0xff]
        %v675 = vld [vmem:[#allocation7 + $0x8] sm:$0xff]
        %v676 = vld [vmem:[#allocation7 + $0x10] sm:$0xff]
        %v677 = vld [vmem:[#allocation7 + $0x18] sm:$0xff]
        %v678 = vld [vmem:[#allocation7 + $0x20] sm:$0xff]
        %v679 = vld [vmem:[#allocation7 + $0x28] sm:$0xff]
        %v680 = vld [vmem:[#allocation7 + $0x30] sm:$0xff]
        %v681 = vld [vmem:[#allocation7 + $0x38] sm:$0xff]
        %v682 = vld [vmem:[#allocation7 + $0x40] sm:$0xff]
        %v683 = vld [vmem:[#allocation7 + $0x48] sm:$0xff]
        %v684 = vld [vmem:[#allocation7 + $0x50] sm:$0xff]
        %v685 = vld [vmem:[#allocation7 + $0x58] sm:$0xff]
        %v686 = vld [vmem:[#allocation7 + $0x60] sm:$0xff]
        %v687 = vld [vmem:[#allocation7 + $0x68] sm:$0xff]
        %v688 = vld [vmem:[#allocation7 + $0x70] sm:$0xff]
        %v689 = vld [vmem:[#allocation7 + $0x78] sm:$0xff]
        %v690 = vld [vmem:[#allocation7 + $0x80] sm:$0xff]
        %v691 = vld [vmem:[#allocation7 + $0x88] sm:$0xff]
        %v692 = vld [vmem:[#allocation7 + $0x90] sm:$0xff]
        %v693 = vld [vmem:[#allocation7 + $0x98] sm:$0xff]
        %v694 = vld [vmem:[#allocation7 + $0xa0] sm:$0xff]
        %v695 = vld [vmem:[#allocation7 + $0xa8] sm:$0xff]
        %v696 = vld [vmem:[#allocation7 + $0xb0] sm:$0xff]
        %v697 = vld [vmem:[#allocation7 + $0xb8] sm:$0xff]
        %v698 = vld [vmem:[#allocation7 + $0xc0] sm:$0xff]
        %v699 = vld [vmem:[#allocation7 + $0xc8] sm:$0xff]
        %v700 = vld [vmem:[#allocation7 + $0xd0] sm:$0xff]
        %v701 = vld [vmem:[#allocation7 + $0xd8] sm:$0xff]
        %v702 = vld [vmem:[#allocation7 + $0xe0] sm:$0xff]
        %v703 = vld [vmem:[#allocation7 + $0xe8] sm:$0xff]
        %v704 = vld [vmem:[#allocation7 + $0xf0] sm:$0xff]
        %v705 = vld [vmem:[#allocation7 + $0xf8] sm:$0xff]
        %v706 = vld [vmem:[#allocation7 + $0x100] sm:$0xff]
        %v707 = vld [vmem:[#allocation7 + $0x108] sm:$0xff]
        %v708 = vld [vmem:[#allocation7 + $0x110] sm:$0xff]
        %v709 = vld [vmem:[#allocation7 + $0x118] sm:$0xff]
        %v710 = vld [vmem:[#allocation7 + $0x120] sm:$0xff]
        %v711 = vld [vmem:[#allocation7 + $0x128] sm:$0xff]
        %v712 = vld [vmem:[#allocation7 + $0x130] sm:$0xff]
        %v713 = vld [vmem:[#allocation7 + $0x138] sm:$0xff]
        %v714 = vld [vmem:[#allocation7 + $0x140] sm:$0xff]
        %v715 = vld [vmem:[#allocation7 + $0x148] sm:$0xff]
        %v716 = vld [vmem:[#allocation7 + $0x150] sm:$0xff]
        %v717 = vld [vmem:[#allocation7 + $0x158] sm:$0xff]
        %v718 = vld [vmem:[#allocation7 + $0x160] sm:$0xff]
        %v719 = vld [vmem:[#allocation7 + $0x168] sm:$0xff]
        %v720 = vld [vmem:[#allocation7 + $0x170] sm:$0xff]
        %v721 = vld [vmem:[#allocation7 + $0x178] sm:$0xff]
        %v722 = vld [vmem:[#allocation7 + $0x180] sm:$0xff]
        %v723 = vld [vmem:[#allocation7 + $0x188] sm:$0xff]
        %v724 = vld [vmem:[#allocation7 + $0x190] sm:$0xff]
        %v725 = vld [vmem:[#allocation7 + $0x198] sm:$0xff]
        %v726 = vld [vmem:[#allocation7 + $0x1a0] sm:$0xff]
        %v727 = vld [vmem:[#allocation7 + $0x1a8] sm:$0xff]
        %v728 = vld [vmem:[#allocation7 + $0x1b0] sm:$0xff]
        %v729 = vld [vmem:[#allocation7 + $0x1b8] sm:$0xff]
        %v730 = vld [vmem:[#allocation7 + $0x1c0] sm:$0xff]
        %v731 = vld [vmem:[#allocation7 + $0x1c8] sm:$0xff]
        %v732 = vld [vmem:[#allocation7 + $0x1d0] sm:$0xff]
        %v733 = vld [vmem:[#allocation7 + $0x1d8] sm:$0xff]
        %v734 = vld [vmem:[#allocation7 + $0x1e0] sm:$0xff]
        %v735 = vld [vmem:[#allocation7 + $0x1e8] sm:$0xff]
        %v736 = vld [vmem:[#allocation7 + $0x1f0] sm:$0xff]
        %v737 = vld [vmem:[#allocation7 + $0x1f8] sm:$0xff]
        %v738 = vcombine.low %v672, %v673
        %v739 = vcombine.high %v672, %v673
        %742 = vmatprep.subr.mxu0 %v705
        %743 = vmatpush1.msra.mxu0 %v704
        %744 = vmatprep.subr.mxu0 %v703
        %745 = vmatpush1.msra.mxu0 %v702
        %746 = vmatprep.subr.mxu0 %v701
        %747 = vmatpush1.msra.mxu0 %v700
        %748 = vmatprep.subr.mxu0 %v699
        %749 = vmatpush1.msra.mxu0 %v698
        %750 = vmatprep.subr.mxu0 %v697
        %751 = vmatpush1.msra.mxu0 %v696
        %752 = vmatprep.subr.mxu0 %v695
        %753 = vmatpush1.msra.mxu0 %v694
        %754 = vmatprep.subr.mxu0 %v693
        %755 = vmatpush1.msra.mxu0 %v692
        %756 = vmatprep.subr.mxu0 %v691
        %757 = vmatpush1.msra.mxu0 %v690
        %758 = vmatprep.subr.mxu0 %v689
        %759 = vmatpush1.msra.mxu0 %v688
        %760 = vmatprep.subr.mxu0 %v687
        %761 = vmatpush1.msra.mxu0 %v686
        %762 = vmatprep.subr.mxu0 %v685
        %763 = vmatpush1.msra.mxu0 %v684
        %764 = vmatprep.subr.mxu0 %v683
        %765 = vmatpush1.msra.mxu0 %v682
        %766 = vmatprep.subr.mxu0 %v681
        %767 = vmatpush1.msra.mxu0 %v680
        %768 = vmatprep.subr.mxu0 %v679
        %769 = vmatpush1.msra.mxu0 %v678
        %770 = vmatprep.subr.mxu0 %v677
        %771 = vmatpush1.msra.mxu0 %v676
        %772 = vmatprep.subr.mxu0 %v675
        %773 = vmatpush1.msra.mxu0 %v674
        %774 = vmatprep.subr.mxu0 %v737
        %775 = vmatpush2.msra.mxu0 %v736
        %776 = vmatprep.subr.mxu0 %v735
        %777 = vmatpush2.msra.mxu0 %v734
        %778 = vmatprep.subr.mxu0 %v733
        %779 = vmatpush2.msra.mxu0 %v732
        %780 = vmatprep.subr.mxu0 %v731
        %781 = vmatpush2.msra.mxu0 %v730
        %782 = vmatprep.subr.mxu0 %v729
        %783 = vmatpush2.msra.mxu0 %v728
        %784 = vmatprep.subr.mxu0 %v727
        %785 = vmatpush2.msra.mxu0 %v726
        %786 = vmatprep.subr.mxu0 %v725
        %787 = vmatpush2.msra.mxu0 %v724
        %788 = vmatprep.subr.mxu0 %v723
        %789 = vmatpush2.msra.mxu0 %v722
        %790 = vmatprep.subr.mxu0 %v721
        %791 = vmatpush2.msra.mxu0 %v720
        %792 = vmatprep.subr.mxu0 %v719
        %793 = vmatpush2.msra.mxu0 %v718
        %794 = vmatprep.subr.mxu0 %v717
        %795 = vmatpush2.msra.mxu0 %v716
        %796 = vmatprep.subr.mxu0 %v715
        %797 = vmatpush2.msra.mxu0 %v714
        %798 = vmatprep.subr.mxu0 %v713
        %799 = vmatpush2.msra.mxu0 %v712
        %800 = vmatprep.subr.mxu0 %v711
        %801 = vmatpush2.msra.mxu0 %v710
        %802 = vmatprep.subr.mxu0 %v709
        %803 = vmatpush2.msra.mxu0 %v708
        %804 = vmatprep.subr.mxu0 %v707
        %805 = vmatpush2.msra.mxu0 %v706
        %806 = vmatprep.mubr.f32.mxu0 %v739
        %807 = vmatmul.mubr.f32.gmra.mxu0 %v738
        %v808 = vpop.f32.mrf.mxu0
        %v809 = vadd.f32 0.0, %v808
        %v810 = vpop.f32.mrf.mxu0
        %v811 = vadd.f32 0.0, %v810
        %812 = vdwg.mxu0
        %v815 = vcombine.low %v809, %v811
        %v816 = vcombine.high %v809, %v811
        %v819 = vadd.f32 %v815, %v315
        %v820 = vadd.f32 %v816, %v316
        %821 = vst [vmem:[%s312] sm:$0xff] %v819
        %822 = vst [vmem:[%s312 + $0x8] sm:$0xff] %v820
        %s823 = sand.u32 %s164, 1
        %s824 = scalar_lea.sflag [#allocation4], %s823
        %s825 = sand.u32 %s164, 1
        %s826 = smul.addr %s825, 16
        %s827 = scalar_lea.vmem [#allocation10], %s826
        // Predicated region
        $region61: #{tpu_custom_call.1} parent=43 // pred_check
          %p828 = pneg %p174
        $region62: #{tpu_custom_call.1} parent=43 // pred_check_branch
          %830 = sbr.rel (%p828) target = $region64
        $region63: #{tpu_custom_call.1} parent=43 // pred_region
          %s831 = smul.u32 2, %s25
          %s833 = ssub.s32 256, 256
          %834 = vsyncadd %s824, %s833
          %s835 = smul.addr %s831, 2
          %s836 = smul.addr %s835, 64
          %s837 = scalar_lea.hbm %s6, %s836
          %s838 = sshll.u32 %s827, 4
          %s839 = int_to_ptr.vmem [resolvable:$true] %s838
          %844 = dma.vmem_to_hbm [thread:$0]  %s839, 256, %s837, %s824, 128, 128, 8
        $region64: #{tpu_custom_call.1} parent=43 // pred_fallthru
          _
      $region44: #{tpu_custom_call.1} parent=5 // pred_fallthru
        _
      %p845 = scmp.le.s32.totalorder 2, %s20
      // Predicated region
      $region65: #{tpu_custom_call.1} parent=5 // pred_check
        %p846 = pneg %p845
      $region66: #{tpu_custom_call.1} parent=5 // pred_check_branch
        %848 = sbr.rel (%p846) target = $region68
      $region67: #{tpu_custom_call.1} parent=5 // pred_region
        %s849 = ssub.s32 %s20, 2
        // Predicated region
        $region69: #{tpu_custom_call.1} parent=67 // pred_check
          %p850 = pneg %p180
        $region70: #{tpu_custom_call.1} parent=67 // pred_check_branch
          %852 = sbr.rel (%p850) target = $region72
        $region71: #{tpu_custom_call.1} parent=67 // pred_region
          %s853 = sand.u32 %s165, 1
          %s854 = scalar_lea.sflag [#allocation4], %s853
          %s855 = sand.u32 %s165, 1
          %s856 = smul.addr %s855, 16
          %s857 = scalar_lea.vmem [#allocation10], %s856
          %858 = dma.done %s854, 256
        $region72: #{tpu_custom_call.1} parent=67 // pred_fallthru
          _
      $region68: #{tpu_custom_call.1} parent=5 // pred_fallthru
        _
    $region6: #{tpu_custom_call.1} parent=1 // loop_footer
      %s24 = sadd.s32 1, %s20
    $region7: #{tpu_custom_call.1} parent=1 // loop_footer_branch
      %19 = sbr.rel target = $region3
    $region8: #{tpu_custom_call.1} parent=1 // loop_exit
      _
    %859 = vsyncpa [#allocation3], 1
    %s860 = scalar_lea.sflag [#allocation3], 1
    %861 = vsyncpa %s860, 1
    %862 = vsyncpa [#allocation6], 1
    %863 = vsyncpa [#allocation9], 1
    %864 = vsyncpa [#allocation4], 1
    %s865 = scalar_lea.sflag [#allocation4], 1
    %866 = vsyncpa %s865, 1

</llo_original>
